<compile_context>
chip_gen: v7x
topology: tpu7x:2x2x1
jax: 0.10.0
libtpu: 0.0.40
codegen_flags: <defaults>
</compile_context>

<pallas_src>
import functools
import math

import numpy as np
import jax
import jax.numpy as jnp
from jax.experimental import pallas as pl
from jax.experimental.pallas import tpu as pltpu


_BN_EPS = 1e-5
_VMEM_LIMIT = 32 * 1024 * 1024          # explicit, v7x-safe scoped VMEM bound


def _round_up(x, m):
    return (x + m - 1) // m * m


# ---------------------------------------------------------------------------
# Kernel 1: row-tiled 1x1 conv (matmul) + folded BN + PReLU
# ---------------------------------------------------------------------------
def _mm_bn_prelu_kernel(x_ref, w_ref, s_ref, b_ref, o_ref, *, alpha):
    # x_ref: (TN, Cin_p) bf16   w_ref: (Cin_p, CP) bf16   s/b: (1, CP) f32
    acc = jnp.dot(x_ref[...], w_ref[...], preferred_element_type=jnp.float32)
    y = acc * s_ref[...] + b_ref[...]                 # folded BatchNorm (eval)
    if alpha != 1.0:                                  # PReLU (skip if identity)
        y = jnp.maximum(y, 0.0) + alpha * jnp.minimum(y, 0.0)
    o_ref[...] = y.astype(o_ref.dtype)


def conv1x1_bn_prelu(x_nhwc, w, scale, bias, *, alpha, row_tile=512,
                     out_dtype=jnp.bfloat16):
    """Fused 1x1 conv + folded BN + PReLU.  Returns (B, H, W, CP);
    valid output channels live in [..., :Cout]."""
    b, h, wdt, cin = x_nhwc.shape
    cout = w.shape[1]
    cin_p = _round_up(cin, 8)              # contraction dim -> sublane multiple
    cp = _round_up(cout, 128)              # lane-dense output
    n = b * h * wdt
    tn = min(row_tile, _round_up(n, 8))
    n_p = _round_up(n, tn)

    x2 = jnp.pad(x_nhwc.reshape(n, cin).astype(jnp.bfloat16),
                 ((0, n_p - n), (0, cin_p - cin)))
    w_p = jnp.pad(w.astype(jnp.bfloat16), ((0, cin_p - cin), (0, cp - cout)))
    s_p = jnp.pad(scale.astype(jnp.float32), (0, cp - cout)).reshape(1, cp)
    b_p = jnp.pad(bias.astype(jnp.float32), (0, cp - cout)).reshape(1, cp)

    kern = functools.partial(_mm_bn_prelu_kernel, alpha=float(alpha))
    out = pl.pallas_call(
        kern,
        out_shape=jax.ShapeDtypeStruct((n_p, cp), out_dtype),
        grid=(n_p // tn,),
        in_specs=[
            pl.BlockSpec((tn, cin_p), lambda i: (i, 0)),       # row tiles
            pl.BlockSpec((cin_p, cp), lambda i: (0, 0)),       # resident weight
            pl.BlockSpec((1, cp), lambda i: (0, 0)),           # resident scale
            pl.BlockSpec((1, cp), lambda i: (0, 0)),           # resident bias
        ],
        out_specs=pl.BlockSpec((tn, cp), lambda i: (i, 0)),
        compiler_params=pltpu.CompilerParams(
            dimension_semantics=("parallel",),
            vmem_limit_bytes=_VMEM_LIMIT),
    )(x2, w_p, s_p, b_p)
    return out[:n].reshape(b, h, wdt, cp)


# ---------------------------------------------------------------------------
# Kernel 2: fused dilated 3x3 "same" conv (+ folded BN + PReLU + channel max)
#           as 9 accumulated shifted matmuls over a halo row-window.
# ---------------------------------------------------------------------------
def _conv3x3_bn_prelu_kernel(x_ref, w_ref, s_ref, b_ref, o_ref, *,
                             dil, th, wo, cout, cp, alpha, with_max,
                             apply_scale):
    # x_ref: (TH+2d, WO+2d, Cin_p) bf16 halo window
    # w_ref: (9, Cin_p, CP) bf16    s_ref/b_ref: (1, CP) f32
    # o_ref: (TH, WO, CP)
    rows = th * wo
    cin_p = x_ref.shape[-1]
    acc = jnp.zeros((rows, cp), jnp.float32)
    for t in range(9):                                 # unrolled 9-tap MXU loop
        ky, kx = divmod(t, 3)
        xs = x_ref[ky * dil: ky * dil + th, kx * dil: kx * dil + wo, :]
        acc = acc + jnp.dot(xs.reshape(rows, cin_p), w_ref[t],
                            preferred_element_type=jnp.float32)
    if apply_scale:
        y = acc * s_ref[...] + b_ref[...]              # folded BatchNorm (eval)
    else:
        y = acc + b_ref[...]                           # plain conv bias
    if alpha != 1.0:                                   # PReLU (skip if identity)
        y = jnp.maximum(y, 0.0) + alpha * jnp.minimum(y, 0.0)
    if with_max:
        # channel-wise max over the valid Cout lanes, packed as lane `cout`
        # of the lane-dense output (no separate (N, 1) masked-store output).
        lane = jax.lax.broadcasted_iota(jnp.int32, (rows, cp), 1)
        ymax = jnp.max(jnp.where(lane < cout, y, -jnp.inf),
                       axis=-1, keepdims=True)
        y = jnp.where(lane == cout, ymax, y)
    o_ref[...] = y.reshape(th, wo, cp).astype(o_ref.dtype)


def conv3x3_bn_prelu(x_nhwc, w, scale, bias, *, dilation, alpha, with_max,
                     apply_scale=True, row_tile=32, out_dtype=jnp.bfloat16):
    """Fused dilated 3x3 'same' conv + folded BN + PReLU (+ channel max).

    Returns (B, H, W, CP); valid conv channels in [..., :Cout]; if with_max,
    the channel-wise max is in lane [..., Cout:Cout+1]."""
    b, h, wdt, cin = x_nhwc.shape
    cout = w.shape[-1]
    d = int(dilation)
    cin_p = _round_up(cin, 8)
    cp = _round_up(cout + (1 if with_max else 0), 128)

    th = min(row_tile, h)                  # output rows per grid step
    h_p = _round_up(h, th)
    n_t = h_p // th
    wo = _round_up(wdt, 8)                 # sublane-friendly output width

    # zero 'same' padding + alignment padding; channels padded to Cin_p.
    xp = jnp.pad(x_nhwc.astype(jnp.bfloat16),
                 ((0, 0),
                  (d, d + (h_p - h)),
                  (d, d + (wo - wdt)),
                  (0, cin_p - cin)))
    # Halo-materialized row windows: (B, nT, TH+2d, WO+2d, Cin_p).  Only the
    # 2d halo rows are duplicated (vs 9x for im2col) and standard Blocked
    # BlockSpecs keep the automatic double-buffered pipeline.
    wins = jnp.stack([xp[:, i * th: i * th + th + 2 * d] for i in range(n_t)],
                     axis=1)

    w_p = jnp.pad(w.astype(jnp.bfloat16),
                  ((0, 0), (0, 0), (0, cin_p - cin), (0, cp - cout)))
    w_p = w_p.reshape(9, cin_p, cp)
    s_p = jnp.pad(scale.astype(jnp.float32), (0, cp - cout)).reshape(1, cp)
    b_p = jnp.pad(bias.astype(jnp.float32), (0, cp - cout)).reshape(1, cp)

    kern = functools.partial(
        _conv3x3_bn_prelu_kernel, dil=d, th=th, wo=wo, cout=cout, cp=cp,
        alpha=float(alpha), with_max=bool(with_max),
        apply_scale=bool(apply_scale))
    out = pl.pallas_call(
        kern,
        out_shape=jax.ShapeDtypeStruct((b, n_t, th, wo, cp), out_dtype),
        grid=(b, n_t),
        in_specs=[
            pl.BlockSpec((None, None, th + 2 * d, wo + 2 * d, cin_p),
                         lambda bi, ti: (bi, ti, 0, 0, 0)),
            pl.BlockSpec((9, cin_p, cp), lambda bi, ti: (0, 0, 0)),  # resident
            pl.BlockSpec((1, cp), lambda bi, ti: (0, 0)),            # resident
            pl.BlockSpec((1, cp), lambda bi, ti: (0, 0)),            # resident
        ],
        out_specs=pl.BlockSpec((None, None, th, wo, cp),
                               lambda bi, ti: (bi, ti, 0, 0, 0)),
        compiler_params=pltpu.CompilerParams(
            dimension_semantics=("parallel", "parallel"),
            vmem_limit_bytes=_VMEM_LIMIT),
    )(wins, w_p, s_p, b_p)

    out = out.reshape(b, h_p, wo, cp)[:, :h, :wdt, :]
    return out


# ---------------------------------------------------------------------------
# Parameter construction (deterministic, kaiming-normal fan_in / relu)
# ---------------------------------------------------------------------------
def _kaiming(key, shape, fan_in):
    return jax.random.normal(key, shape, jnp.float32) * np.sqrt(2.0 / fan_in)


def init_params(key, scales, in_channel, channel):
    width = math.ceil(channel / scales)
    bn_scale = lambda c: jnp.full((c,), 1.0 / np.sqrt(1.0 + _BN_EPS), jnp.float32)
    bn_bias = lambda c: jnp.zeros((c,), jnp.float32)

    n_scb = scales - 1
    keys = jax.random.split(key, 1 + n_scb + 3)
    params = {"scales": scales, "channel": channel, "width": width}

    # convert: 1x1 conv (in_channel -> channel) + BN + PReLU
    params["convert"] = {
        "w": _kaiming(keys[0], (in_channel, channel), in_channel),
        "scale": bn_scale(channel), "bias": bn_bias(channel), "alpha": 0.25,
    }

    # SplitConvBlock convs (scales-1 of them), dilations 1,2,4,6,8
    dilations = [1, 2, 4, 6, 8]
    scb = []
    for i in range(n_scb):
        cin = width if (scales == 6 and i == 0) else width + 1
        scb.append({
            "w": _kaiming(keys[1 + i], (3, 3, cin, width), cin * 9),
            "scale": bn_scale(width), "bias": bn_bias(width),
            "alpha": 0.25, "dilation": dilations[i],
        })
    params["scb"] = scb

    # convs head: (channel+1 -> channel) BN PReLU, (channel -> channel) BN
    # PReLU, (channel -> 1) conv with bias, no BN / no activation.
    params["convs"] = [
        {"w": _kaiming(keys[1 + n_scb], (3, 3, channel + 1, channel),
                       (channel + 1) * 9),
         "scale": bn_scale(channel), "bias": bn_bias(channel),
         "alpha": 0.25, "apply_scale": True},
        {"w": _kaiming(keys[2 + n_scb], (3, 3, channel, channel), channel * 9),
         "scale": bn_scale(channel), "bias": bn_bias(channel),
         "alpha": 0.25, "apply_scale": True},
        {"w": _kaiming(keys[3 + n_scb], (3, 3, channel, 1), channel * 9),
         "scale": jnp.ones((1,), jnp.float32),            # no BN
         "bias": jnp.zeros((1,), jnp.float32),            # conv bias (init 0)
         "alpha": 1.0, "apply_scale": False},             # no activation
    ]
    return params


# ---------------------------------------------------------------------------
# Decoder forward
# ---------------------------------------------------------------------------
def decoder_forward(params, x_nchw, y_nchw):
    """x_nchw: (B, in_channel, H, W); y_nchw: (B, 1, H, W). Returns (B,1,H,W)."""
    channel = params["channel"]
    scales = params["scales"]
    width = params["width"]

    x = jnp.transpose(x_nchw, (0, 2, 3, 1)).astype(jnp.float32)   # NHWC
    y = jnp.transpose(y_nchw, (0, 2, 3, 1)).astype(jnp.float32)   # (B,H,W,1)

    # convert: 1x1 conv + BN + PReLU (row-tiled fused matmul)
    p = params["convert"]
    xc = conv1x1_bn_prelu(x, p["w"], p["scale"], p["bias"], alpha=p["alpha"])
    xc = xc[..., :channel]                                        # drop lane pad

    # SplitConvBlock: each stage is one fused conv kernel that also emits the
    # channel-wise max as an extra lane of its (lane-dense) output.
    spx = [xc[..., i * width: min((i + 1) * width, channel)]
           for i in range(scales)]
    cur = y.astype(jnp.bfloat16)                       # running max map (B,H,W,1)
    sps = []
    for i, p in enumerate(params["scb"]):
        if scales == 6 and i == 0:
            inp = spx[0]
        else:
            inp = jnp.concatenate([spx[i], cur], axis=-1)
        out = conv3x3_bn_prelu(inp, p["w"], p["scale"], p["bias"],
                               dilation=p["dilation"], alpha=p["alpha"],
                               with_max=True)
        sps.append(out[..., :width])
        cur = out[..., width:width + 1]
    x2 = jnp.concatenate(sps + [spx[scales - 1], cur], axis=-1)   # (B,H,W,C+1)

    # convs head.  Final conv (Cout=1) is run lane-padded to 128 and sliced;
    # its output stays f32 for the residual add.
    p0, p1, p2 = params["convs"]
    h1 = conv3x3_bn_prelu(x2, p0["w"], p0["scale"], p0["bias"], dilation=1,
                          alpha=p0["alpha"], with_max=False)[..., :channel]
    h2 = conv3x3_bn_prelu(h1, p1["w"], p1["scale"], p1["bias"], dilation=1,
                          alpha=p1["alpha"], with_max=False)[..., :channel]
    h3 = conv3x3_bn_prelu(h2, p2["w"], p2["scale"], p2["bias"], dilation=1,
                          alpha=p2["alpha"], with_max=False,
                          apply_scale=p2["apply_scale"],
                          out_dtype=jnp.float32)[..., :1]

    out = h3 + y                                                  # y is not None
    return jnp.transpose(out, (0, 3, 1, 2))                       # back to NCHW


# ---------------------------------------------------------------------------
if __name__ == "__main__":
    key = jax.random.PRNGKey(0)
    kp, kx, ky = jax.random.split(key, 3)

    scales, in_channel, channel = 4, 8, 8
    B, H, W = 2, 16, 16

    params = init_params(kp, scales, in_channel, channel)
    x = jax.random.normal(kx, (B, in_channel, H, W), jnp.float32)
    y = jax.random.normal(ky, (B, 1, H, W), jnp.float32)

    out = decoder_forward(params, x, y)
    out = jax.block_until_ready(out)
    assert out.shape == (B, 1, H, W), out.shape
    assert bool(jnp.all(jnp.isfinite(out)))
    print("KERNEL_OK")
</pallas_src>

<mosaic_0001>
module attributes {stable_mosaic.version = 11 : i64} {
  func.func @_mm_bn_prelu_kernel(%arg0: i32, %arg1: memref<512x8xbf16, #tpu.memory_space<vmem>>, %arg2: memref<8x128xbf16, #tpu.memory_space<vmem>>, %arg3: memref<1x128xf32, #tpu.memory_space<vmem>>, %arg4: memref<1x128xf32, #tpu.memory_space<vmem>>, %arg5: memref<512x128xbf16, #tpu.memory_space<vmem>>) attributes {dimension_semantics = [#tpu.dimension_semantics<parallel>], iteration_bounds = array<i64: 1>, scalar_prefetch = 0 : i64, scratch_operands = 0 : i64, tpu.core_type = #tpu.core_type<tc>, window_params = [{transform_indices = @transform_0, window_bounds = array<i64: 512, 8>}, {pipeline_mode = #tpu.pipeline_mode<synchronous>, transform_indices = @transform_1, window_bounds = array<i64: 8, 128>}, {pipeline_mode = #tpu.pipeline_mode<synchronous>, transform_indices = @transform_2, window_bounds = array<i64: 1, 128>}, {pipeline_mode = #tpu.pipeline_mode<synchronous>, transform_indices = @transform_3, window_bounds = array<i64: 1, 128>}, {transform_indices = @transform_4, window_bounds = array<i64: 512, 128>}]} {
    %c0 = arith.constant 0 : index
    %c0_0 = arith.constant 0 : index
    %0 = vector.load %arg1[%c0, %c0_0] : memref<512x8xbf16, #tpu.memory_space<vmem>>, vector<512x8xbf16>
    %c0_1 = arith.constant 0 : index
    %c0_2 = arith.constant 0 : index
    %1 = vector.load %arg2[%c0_1, %c0_2] : memref<8x128xbf16, #tpu.memory_space<vmem>>, vector<8x128xbf16>
    %cst = arith.constant dense<0.000000e+00> : vector<512x128xf32>
    %2 = tpu.matmul %0, %1, %cst {dimension_numbers = #tpu.dot_dimension_numbers<[1], [0], [0], [1], [0, 0, 1, 1], [], []>} : vector<512x8xbf16>, vector<8x128xbf16>, vector<512x128xf32> -> vector<512x128xf32>
    %c0_3 = arith.constant 0 : index
    %c0_4 = arith.constant 0 : index
    %3 = vector.load %arg3[%c0_3, %c0_4] : memref<1x128xf32, #tpu.memory_space<vmem>>, vector<1x128xf32>
    %4 = vector.broadcast %3 : vector<1x128xf32> to vector<512x128xf32>
    %5 = arith.mulf %2, %4 : vector<512x128xf32>
    %c0_5 = arith.constant 0 : index
    %c0_6 = arith.constant 0 : index
    %6 = vector.load %arg4[%c0_5, %c0_6] : memref<1x128xf32, #tpu.memory_space<vmem>>, vector<1x128xf32>
    %7 = vector.broadcast %6 : vector<1x128xf32> to vector<512x128xf32>
    %8 = arith.addf %5, %7 : vector<512x128xf32>
    %cst_7 = arith.constant 0.000000e+00 : f32
    %9 = vector.broadcast %cst_7 : f32 to vector<512x128xf32>
    %10 = arith.maximumf %8, %9 : vector<512x128xf32>
    %cst_8 = arith.constant 0.000000e+00 : f32
    %11 = vector.broadcast %cst_8 : f32 to vector<512x128xf32>
    %12 = arith.minimumf %8, %11 : vector<512x128xf32>
    %cst_9 = arith.constant 2.500000e-01 : f32
    %13 = vector.broadcast %cst_9 : f32 to vector<512x128xf32>
    %14 = arith.mulf %13, %12 : vector<512x128xf32>
    %15 = arith.addf %10, %14 : vector<512x128xf32>
    %16 = arith.truncf %15 : vector<512x128xf32> to vector<512x128xbf16>
    %c0_10 = arith.constant 0 : index
    %c0_11 = arith.constant 0 : index
    %17 = vector.load %arg5[%c0_10, %c0_11] : memref<512x128xbf16, #tpu.memory_space<vmem>>, vector<512x128xbf16>
    tpu.vector_store %arg5[%c0_10, %c0_11], %16 {strides = array<i32>} : memref<512x128xbf16, #tpu.memory_space<vmem>>, vector<512x128xbf16>,
    return
  }
  func.func @transform_0(%arg0: i32) -> (i32, i32) {
    %c0_i32 = arith.constant 0 : i32
    %c0_i32_0 = arith.constant 0 : i32
    return %arg0, %c0_i32 : i32, i32
  }
  func.func @transform_1(%arg0: i32) -> (i32, i32) {
    %c0_i32 = arith.constant 0 : i32
    %c0_i32_0 = arith.constant 0 : i32
    %c0_i32_1 = arith.constant 0 : i32
    return %c0_i32, %c0_i32_0 : i32, i32
  }
  func.func @transform_2(%arg0: i32) -> (i32, i32) {
    %c0_i32 = arith.constant 0 : i32
    %c0_i32_0 = arith.constant 0 : i32
    %c0_i32_1 = arith.constant 0 : i32
    return %c0_i32, %c0_i32_0 : i32, i32
  }
  func.func @transform_3(%arg0: i32) -> (i32, i32) {
    %c0_i32 = arith.constant 0 : i32
    %c0_i32_0 = arith.constant 0 : i32
    %c0_i32_1 = arith.constant 0 : i32
    return %c0_i32, %c0_i32_0 : i32, i32
  }
  func.func @transform_4(%arg0: i32) -> (i32, i32) {
    %c0_i32 = arith.constant 0 : i32
    %c0_i32_0 = arith.constant 0 : i32
    return %arg0, %c0_i32 : i32, i32
  }
}

</mosaic_0001>

<llo_original>
// kernel: tpu_custom_call.1
$region0: #{tpu_custom_call.1}
  #allocation0 [shape = 'u32[]', space=smem, size = 0x4, offset = 0x4, fixed_abs, tag = 'smem constant byte address 0x4 - core index']
  #allocation1 [shape = 'u32[144,128]{1,0:T(1,128)}', space=vmem, size = 0x12000, scoped, tag = 'internal scratch']
  %s0 = inlined_call_operand.vmem [shape: bf16[512,8], index: 0, kind: input, shape index: {}]
  %s1 = inlined_call_operand.vmem [shape: bf16[8,128], index: 1, kind: input, shape index: {}]
  %s2 = inlined_call_operand.vmem [shape: f32[1,128], index: 2, kind: input, shape index: {}]
  %s3 = inlined_call_operand.vmem [shape: f32[1,128], index: 3, kind: input, shape index: {}]
  %s4 = inlined_call_operand.hbm [shape: bf16[512,128], index: 4, kind: output, shape index: {}]
  %s5 = sld [smem:[#allocation0]]
  $region26: #{tpu_custom_call.1} parent=0
    _
  %s7 = ssub.s32 1, %s5
  %s8 = scalar_select 0, %s7, %s5
  $region1: #{tpu_custom_call.1} parent=0
    #allocation2 [shape = 'u8[131072]{0}', space=vmem, size = 0x20000, scoped, tag = 'output window, operand 0, single buffered']
    #allocation3 [shape = 's32[1]{0}', space=sflag, size = 0x4, scoped, tag = 'scoped memory for tpu_custom_call.1']
    %9 = vsyncpa [#allocation3], 0
    // Predicated region
    $region2: #{tpu_custom_call.1} parent=1 // pred_check
      _
    $region3: #{tpu_custom_call.1} parent=1 // pred_check_branch
      %11 = sbr.rel (0) target = $region5
    $region4: #{tpu_custom_call.1} parent=1 // pred_region
      _
    $region5: #{tpu_custom_call.1} parent=1 // pred_fallthru
      _
    // Predicated region
    $region6: #{tpu_custom_call.1} parent=1 // pred_check
      _
    $region7: #{tpu_custom_call.1} parent=1 // pred_check_branch
      %13 = sbr.rel (0) target = $region9
    $region8: #{tpu_custom_call.1} parent=1 // pred_region
      _
    $region9: #{tpu_custom_call.1} parent=1 // pred_fallthru
      _
    // Predicated region
    $region10: #{tpu_custom_call.1} parent=1 // pred_check
      _
    $region11: #{tpu_custom_call.1} parent=1 // pred_check_branch
      %15 = sbr.rel (0) target = $region13
    $region12: #{tpu_custom_call.1} parent=1 // pred_region
      _
    $region13: #{tpu_custom_call.1} parent=1 // pred_fallthru
      _
    // Predicated region
    $region14: #{tpu_custom_call.1} parent=1 // pred_check
      _
    $region15: #{tpu_custom_call.1} parent=1 // pred_check_branch
      %17 = sbr.rel (0) target = $region17
    $region16: #{tpu_custom_call.1} parent=1 // pred_region
      _
    $region17: #{tpu_custom_call.1} parent=1 // pred_fallthru
      _
    %v19 = vld [vmem:[%s0] sm:$0xf]
    %v20 = vld [vmem:[%s0 + $0x4] sm:$0xf]
    %v21 = vld [vmem:[%s0 + $0x8] sm:$0xf]
    %v22 = vld [vmem:[%s0 + $0xc] sm:$0xf]
    %v23 = vld [vmem:[%s0 + $0x10] sm:$0xf]
    %v24 = vld [vmem:[%s0 + $0x14] sm:$0xf]
    %v25 = vld [vmem:[%s0 + $0x18] sm:$0xf]
    %v26 = vld [vmem:[%s0 + $0x1c] sm:$0xf]
    %v27 = vld [vmem:[%s0 + $0x20] sm:$0xf]
    %v28 = vld [vmem:[%s0 + $0x24] sm:$0xf]
    %v29 = vld [vmem:[%s0 + $0x28] sm:$0xf]
    %v30 = vld [vmem:[%s0 + $0x2c] sm:$0xf]
    %v31 = vld [vmem:[%s0 + $0x30] sm:$0xf]
    %v32 = vld [vmem:[%s0 + $0x34] sm:$0xf]
    %v33 = vld [vmem:[%s0 + $0x38] sm:$0xf]
    %v34 = vld [vmem:[%s0 + $0x3c] sm:$0xf]
    %v35 = vld [vmem:[%s0 + $0x40] sm:$0xf]
    %v36 = vld [vmem:[%s0 + $0x44] sm:$0xf]
    %v37 = vld [vmem:[%s0 + $0x48] sm:$0xf]
    %v38 = vld [vmem:[%s0 + $0x4c] sm:$0xf]
    %v39 = vld [vmem:[%s0 + $0x50] sm:$0xf]
    %v40 = vld [vmem:[%s0 + $0x54] sm:$0xf]
    %v41 = vld [vmem:[%s0 + $0x58] sm:$0xf]
    %v42 = vld [vmem:[%s0 + $0x5c] sm:$0xf]
    %v43 = vld [vmem:[%s0 + $0x60] sm:$0xf]
    %v44 = vld [vmem:[%s0 + $0x64] sm:$0xf]
    %v45 = vld [vmem:[%s0 + $0x68] sm:$0xf]
    %v46 = vld [vmem:[%s0 + $0x6c] sm:$0xf]
    %v47 = vld [vmem:[%s0 + $0x70] sm:$0xf]
    %v48 = vld [vmem:[%s0 + $0x74] sm:$0xf]
    %v49 = vld [vmem:[%s0 + $0x78] sm:$0xf]
    %v50 = vld [vmem:[%s0 + $0x7c] sm:$0xf]
    %v51 = vld [vmem:[%s0 + $0x80] sm:$0xf]
    %v52 = vld [vmem:[%s0 + $0x84] sm:$0xf]
    %v53 = vld [vmem:[%s0 + $0x88] sm:$0xf]
    %v54 = vld [vmem:[%s0 + $0x8c] sm:$0xf]
    %v55 = vld [vmem:[%s0 + $0x90] sm:$0xf]
    %v56 = vld [vmem:[%s0 + $0x94] sm:$0xf]
    %v57 = vld [vmem:[%s0 + $0x98] sm:$0xf]
    %v58 = vld [vmem:[%s0 + $0x9c] sm:$0xf]
    %v59 = vld [vmem:[%s0 + $0xa0] sm:$0xf]
    %v60 = vld [vmem:[%s0 + $0xa4] sm:$0xf]
    %v61 = vld [vmem:[%s0 + $0xa8] sm:$0xf]
    %v62 = vld [vmem:[%s0 + $0xac] sm:$0xf]
    %v63 = vld [vmem:[%s0 + $0xb0] sm:$0xf]
    %v64 = vld [vmem:[%s0 + $0xb4] sm:$0xf]
    %v65 = vld [vmem:[%s0 + $0xb8] sm:$0xf]
    %v66 = vld [vmem:[%s0 + $0xbc] sm:$0xf]
    %v67 = vld [vmem:[%s0 + $0xc0] sm:$0xf]
    %v68 = vld [vmem:[%s0 + $0xc4] sm:$0xf]
    %v69 = vld [vmem:[%s0 + $0xc8] sm:$0xf]
    %v70 = vld [vmem:[%s0 + $0xcc] sm:$0xf]
    %v71 = vld [vmem:[%s0 + $0xd0] sm:$0xf]
    %v72 = vld [vmem:[%s0 + $0xd4] sm:$0xf]
    %v73 = vld [vmem:[%s0 + $0xd8] sm:$0xf]
    %v74 = vld [vmem:[%s0 + $0xdc] sm:$0xf]
    %v75 = vld [vmem:[%s0 + $0xe0] sm:$0xf]
    %v76 = vld [vmem:[%s0 + $0xe4] sm:$0xf]
    %v77 = vld [vmem:[%s0 + $0xe8] sm:$0xf]
    %v78 = vld [vmem:[%s0 + $0xec] sm:$0xf]
    %v79 = vld [vmem:[%s0 + $0xf0] sm:$0xf]
    %v80 = vld [vmem:[%s0 + $0xf4] sm:$0xf]
    %v81 = vld [vmem:[%s0 + $0xf8] sm:$0xf]
    %v82 = vld [vmem:[%s0 + $0xfc] sm:$0xf]
    %v83 = vld [vmem:[%s1] sm:$0xf]
    %v148 = vunpack.c.l.b16 %v19
    %v149 = vunpack.c.l.b16 %v20
    %v150 = vunpack.c.l.b16 %v21
    %v151 = vunpack.c.l.b16 %v22
    %v152 = vunpack.c.l.b16 %v23
    %v153 = vunpack.c.l.b16 %v24
    %v154 = vunpack.c.l.b16 %v25
    %v155 = vunpack.c.l.b16 %v26
    %v156 = vunpack.c.l.b16 %v27
    %v157 = vunpack.c.l.b16 %v28
    %v158 = vunpack.c.l.b16 %v29
    %v159 = vunpack.c.l.b16 %v30
    %v160 = vunpack.c.l.b16 %v31
    %v161 = vunpack.c.l.b16 %v32
    %v162 = vunpack.c.l.b16 %v33
    %v163 = vunpack.c.l.b16 %v34
    %v164 = vunpack.c.l.b16 %v35
    %v165 = vunpack.c.l.b16 %v36
    %v166 = vunpack.c.l.b16 %v37
    %v167 = vunpack.c.l.b16 %v38
    %v168 = vunpack.c.l.b16 %v39
    %v169 = vunpack.c.l.b16 %v40
    %v170 = vunpack.c.l.b16 %v41
    %v171 = vunpack.c.l.b16 %v42
    %v172 = vunpack.c.l.b16 %v43
    %v173 = vunpack.c.l.b16 %v44
    %v174 = vunpack.c.l.b16 %v45
    %v175 = vunpack.c.l.b16 %v46
    %v176 = vunpack.c.l.b16 %v47
    %v177 = vunpack.c.l.b16 %v48
    %v178 = vunpack.c.l.b16 %v49
    %v179 = vunpack.c.l.b16 %v50
    %v180 = vunpack.c.l.b16 %v51
    %v181 = vunpack.c.l.b16 %v52
    %v182 = vunpack.c.l.b16 %v53
    %v183 = vunpack.c.l.b16 %v54
    %v184 = vunpack.c.l.b16 %v55
    %v185 = vunpack.c.l.b16 %v56
    %v186 = vunpack.c.l.b16 %v57
    %v187 = vunpack.c.l.b16 %v58
    %v188 = vunpack.c.l.b16 %v59
    %v189 = vunpack.c.l.b16 %v60
    %v190 = vunpack.c.l.b16 %v61
    %v191 = vunpack.c.l.b16 %v62
    %v192 = vunpack.c.l.b16 %v63
    %v193 = vunpack.c.l.b16 %v64
    %v194 = vunpack.c.l.b16 %v65
    %v195 = vunpack.c.l.b16 %v66
    %v196 = vunpack.c.l.b16 %v67
    %v197 = vunpack.c.l.b16 %v68
    %v198 = vunpack.c.l.b16 %v69
    %v199 = vunpack.c.l.b16 %v70
    %v200 = vunpack.c.l.b16 %v71
    %v201 = vunpack.c.l.b16 %v72
    %v202 = vunpack.c.l.b16 %v73
    %v203 = vunpack.c.l.b16 %v74
    %v204 = vunpack.c.l.b16 %v75
    %v205 = vunpack.c.l.b16 %v76
    %v206 = vunpack.c.l.b16 %v77
    %v207 = vunpack.c.l.b16 %v78
    %v208 = vunpack.c.l.b16 %v79
    %v209 = vunpack.c.l.b16 %v80
    %v210 = vunpack.c.l.b16 %v81
    %v211 = vunpack.c.l.b16 %v82
    %v212 = vpack.c.b16 %v149, %v148
    %v213 = vpack.c.b16 %v151, %v150
    %v214 = vpack.c.b16 %v153, %v152
    %v215 = vpack.c.b16 %v155, %v154
    %v216 = vpack.c.b16 %v157, %v156
    %v217 = vpack.c.b16 %v159, %v158
    %v218 = vpack.c.b16 %v161, %v160
    %v219 = vpack.c.b16 %v163, %v162
    %v220 = vpack.c.b16 %v165, %v164
    %v221 = vpack.c.b16 %v167, %v166
    %v222 = vpack.c.b16 %v169, %v168
    %v223 = vpack.c.b16 %v171, %v170
    %v224 = vpack.c.b16 %v173, %v172
    %v225 = vpack.c.b16 %v175, %v174
    %v226 = vpack.c.b16 %v177, %v176
    %v227 = vpack.c.b16 %v179, %v178
    %v228 = vpack.c.b16 %v181, %v180
    %v229 = vpack.c.b16 %v183, %v182
    %v230 = vpack.c.b16 %v185, %v184
    %v231 = vpack.c.b16 %v187, %v186
    %v232 = vpack.c.b16 %v189, %v188
    %v233 = vpack.c.b16 %v191, %v190
    %v234 = vpack.c.b16 %v193, %v192
    %v235 = vpack.c.b16 %v195, %v194
    %v236 = vpack.c.b16 %v197, %v196
    %v237 = vpack.c.b16 %v199, %v198
    %v238 = vpack.c.b16 %v201, %v200
    %v239 = vpack.c.b16 %v203, %v202
    %v240 = vpack.c.b16 %v205, %v204
    %v241 = vpack.c.b16 %v207, %v206
    %v242 = vpack.c.b16 %v209, %v208
    %v243 = vpack.c.b16 %v211, %v210
    %vm244 = vcmask 64512
    %v246 = vsel %vm244, %v212, 0
    %v249 = vsel %vm244, %v213, 0
    %v252 = vsel %vm244, %v214, 0
    %v255 = vsel %vm244, %v215, 0
    %v258 = vsel %vm244, %v216, 0
    %v261 = vsel %vm244, %v217, 0
    %v264 = vsel %vm244, %v218, 0
    %v267 = vsel %vm244, %v219, 0
    %v270 = vsel %vm244, %v220, 0
    %v273 = vsel %vm244, %v221, 0
    %v276 = vsel %vm244, %v222, 0
    %v279 = vsel %vm244, %v223, 0
    %v282 = vsel %vm244, %v224, 0
    %v285 = vsel %vm244, %v225, 0
    %v288 = vsel %vm244, %v226, 0
    %v291 = vsel %vm244, %v227, 0
    %v294 = vsel %vm244, %v228, 0
    %v297 = vsel %vm244, %v229, 0
    %v300 = vsel %vm244, %v230, 0
    %v303 = vsel %vm244, %v231, 0
    %v306 = vsel %vm244, %v232, 0
    %v309 = vsel %vm244, %v233, 0
    %v312 = vsel %vm244, %v234, 0
    %v315 = vsel %vm244, %v235, 0
    %v318 = vsel %vm244, %v236, 0
    %v321 = vsel %vm244, %v237, 0
    %v324 = vsel %vm244, %v238, 0
    %v327 = vsel %vm244, %v239, 0
    %v330 = vsel %vm244, %v240, 0
    %v333 = vsel %vm244, %v241, 0
    %v336 = vsel %vm244, %v242, 0
    %v339 = vsel %vm244, %v243, 0
    %vm341 = vcmask 1043456
    %v343 = vsel %vm341, %v83, 0
    %345 = vmatprep.subr.bf16.mxu0 0
    %346 = vmatpush1.bf16.msra.mxu0 %v343
    %347 = vmatprep.subr.bf16.mxu0 0
    %348 = vmatpush1.bf16.msra.mxu0 0
    %349 = vmatprep.subr.bf16.mxu0 0
    %350 = vmatpush1.bf16.msra.mxu0 0
    %351 = vmatprep.subr.bf16.mxu0 0
    %352 = vmatpush1.bf16.msra.mxu0 0
    %353 = vmatprep.subr.bf16.mxu0 0
    %354 = vmatpush1.bf16.msra.mxu0 0
    %355 = vmatprep.subr.bf16.mxu0 0
    %356 = vmatpush1.bf16.msra.mxu0 0
    %357 = vmatprep.subr.bf16.mxu0 0
    %358 = vmatpush1.bf16.msra.mxu0 0
    %359 = vmatprep.subr.bf16.mxu0 0
    %360 = vmatpush1.bf16.msra.mxu0 0
    %361 = vmatprep.subr.bf16.mxu0 0
    %362 = vmatpush1.bf16.msra.mxu0 0
    %363 = vmatprep.subr.bf16.mxu0 0
    %364 = vmatpush1.bf16.msra.mxu0 0
    %365 = vmatprep.subr.bf16.mxu0 0
    %366 = vmatpush1.bf16.msra.mxu0 0
    %367 = vmatprep.subr.bf16.mxu0 0
    %368 = vmatpush1.bf16.msra.mxu0 0
    %369 = vmatprep.subr.bf16.mxu0 0
    %370 = vmatpush1.bf16.msra.mxu0 0
    %371 = vmatprep.subr.bf16.mxu0 0
    %372 = vmatpush1.bf16.msra.mxu0 0
    %373 = vmatprep.subr.bf16.mxu0 0
    %374 = vmatpush1.bf16.msra.mxu0 0
    %375 = vmatprep.subr.bf16.mxu0 0
    %376 = vmatpush1.bf16.msra.mxu0 0
    %377 = vmatprep.mubr.bf16.mxu0 0
    %378 = vmatmul.mubr.bf16.gmra.mrb[0].mxu0 %v246
    %v379 = vpop.f32.mrb[0].mxu0
    %v380 = vadd.f32 0.0, %v379
    %v381 = vpop.f32.mrb[0].mxu0
    %v382 = vpop.f32.mrb[0].mxu0
    %v383 = vadd.f32 0.0, %v382
    %v384 = vpop.f32.mrb[0].mxu0
    %385 = vmatprep.mubr.bf16.mxu0 0
    %386 = vmatmul.mubr.bf16.gmra.mrb[0].mxu0 %v249
    %v387 = vpop.f32.mrb[0].mxu0
    %v388 = vadd.f32 0.0, %v387
    %v389 = vpop.f32.mrb[0].mxu0
    %v390 = vpop.f32.mrb[0].mxu0
    %v391 = vadd.f32 0.0, %v390
    %v392 = vpop.f32.mrb[0].mxu0
    %393 = vmatprep.mubr.bf16.mxu0 0
    %394 = vmatmul.mubr.bf16.gmra.mrb[0].mxu0 %v252
    %v395 = vpop.f32.mrb[0].mxu0
    %v396 = vadd.f32 0.0, %v395
    %v397 = vpop.f32.mrb[0].mxu0
    %v398 = vpop.f32.mrb[0].mxu0
    %v399 = vadd.f32 0.0, %v398
    %v400 = vpop.f32.mrb[0].mxu0
    %401 = vmatprep.mubr.bf16.mxu0 0
    %402 = vmatmul.mubr.bf16.gmra.mrb[0].mxu0 %v255
    %v403 = vpop.f32.mrb[0].mxu0
    %v404 = vadd.f32 0.0, %v403
    %v405 = vpop.f32.mrb[0].mxu0
    %v406 = vpop.f32.mrb[0].mxu0
    %v407 = vadd.f32 0.0, %v406
    %v408 = vpop.f32.mrb[0].mxu0
    %409 = vmatprep.mubr.bf16.mxu0 0
    %410 = vmatmul.mubr.bf16.gmra.mrb[0].mxu0 %v258
    %v411 = vpop.f32.mrb[0].mxu0
    %v412 = vadd.f32 0.0, %v411
    %v413 = vpop.f32.mrb[0].mxu0
    %v414 = vpop.f32.mrb[0].mxu0
    %v415 = vadd.f32 0.0, %v414
    %v416 = vpop.f32.mrb[0].mxu0
    %417 = vmatprep.mubr.bf16.mxu0 0
    %418 = vmatmul.mubr.bf16.gmra.mrb[0].mxu0 %v261
    %v419 = vpop.f32.mrb[0].mxu0
    %v420 = vadd.f32 0.0, %v419
    %v421 = vpop.f32.mrb[0].mxu0
    %v422 = vpop.f32.mrb[0].mxu0
    %v423 = vadd.f32 0.0, %v422
    %v424 = vpop.f32.mrb[0].mxu0
    %425 = vmatprep.mubr.bf16.mxu0 0
    %426 = vmatmul.mubr.bf16.gmra.mrb[0].mxu0 %v264
    %v427 = vpop.f32.mrb[0].mxu0
    %v428 = vadd.f32 0.0, %v427
    %v429 = vpop.f32.mrb[0].mxu0
    %v430 = vpop.f32.mrb[0].mxu0
    %v431 = vadd.f32 0.0, %v430
    %v432 = vpop.f32.mrb[0].mxu0
    %433 = vmatprep.mubr.bf16.mxu0 0
    %434 = vmatmul.mubr.bf16.gmra.mrb[0].mxu0 %v267
    %v435 = vpop.f32.mrb[0].mxu0
    %v436 = vadd.f32 0.0, %v435
    %v437 = vpop.f32.mrb[0].mxu0
    %v438 = vpop.f32.mrb[0].mxu0
    %v439 = vadd.f32 0.0, %v438
    %v440 = vpop.f32.mrb[0].mxu0
    %441 = vmatprep.mubr.bf16.mxu0 0
    %442 = vmatmul.mubr.bf16.gmra.mrb[0].mxu0 %v270
    %v443 = vpop.f32.mrb[0].mxu0
    %v444 = vadd.f32 0.0, %v443
    %v445 = vpop.f32.mrb[0].mxu0
    %v446 = vpop.f32.mrb[0].mxu0
    %v447 = vadd.f32 0.0, %v446
    %v448 = vpop.f32.mrb[0].mxu0
    %449 = vmatprep.mubr.bf16.mxu0 0
    %450 = vmatmul.mubr.bf16.gmra.mrb[0].mxu0 %v273
    %v451 = vpop.f32.mrb[0].mxu0
    %v452 = vadd.f32 0.0, %v451
    %v453 = vpop.f32.mrb[0].mxu0
    %v454 = vpop.f32.mrb[0].mxu0
    %v455 = vadd.f32 0.0, %v454
    %v456 = vpop.f32.mrb[0].mxu0
    %457 = vmatprep.mubr.bf16.mxu0 0
    %458 = vmatmul.mubr.bf16.gmra.mrb[0].mxu0 %v276
    %v459 = vpop.f32.mrb[0].mxu0
    %v460 = vadd.f32 0.0, %v459
    %v461 = vpop.f32.mrb[0].mxu0
    %v462 = vpop.f32.mrb[0].mxu0
    %v463 = vadd.f32 0.0, %v462
    %v464 = vpop.f32.mrb[0].mxu0
    %465 = vmatprep.mubr.bf16.mxu0 0
    %466 = vmatmul.mubr.bf16.gmra.mrb[0].mxu0 %v279
    %v467 = vpop.f32.mrb[0].mxu0
    %v468 = vadd.f32 0.0, %v467
    %v469 = vpop.f32.mrb[0].mxu0
    %v470 = vpop.f32.mrb[0].mxu0
    %v471 = vadd.f32 0.0, %v470
    %v472 = vpop.f32.mrb[0].mxu0
    %473 = vmatprep.mubr.bf16.mxu0 0
    %474 = vmatmul.mubr.bf16.gmra.mrb[0].mxu0 %v282
    %v475 = vpop.f32.mrb[0].mxu0
    %v476 = vadd.f32 0.0, %v475
    %v477 = vpop.f32.mrb[0].mxu0
    %v478 = vpop.f32.mrb[0].mxu0
    %v479 = vadd.f32 0.0, %v478
    %v480 = vpop.f32.mrb[0].mxu0
    %481 = vmatprep.mubr.bf16.mxu0 0
    %482 = vmatmul.mubr.bf16.gmra.mrb[0].mxu0 %v285
    %v483 = vpop.f32.mrb[0].mxu0
    %v484 = vadd.f32 0.0, %v483
    %v485 = vpop.f32.mrb[0].mxu0
    %v486 = vpop.f32.mrb[0].mxu0
    %v487 = vadd.f32 0.0, %v486
    %v488 = vpop.f32.mrb[0].mxu0
    %489 = vmatprep.mubr.bf16.mxu0 0
    %490 = vmatmul.mubr.bf16.gmra.mrb[0].mxu0 %v288
    %v491 = vpop.f32.mrb[0].mxu0
    %v492 = vadd.f32 0.0, %v491
    %v493 = vpop.f32.mrb[0].mxu0
    %v494 = vpop.f32.mrb[0].mxu0
    %v495 = vadd.f32 0.0, %v494
    %v496 = vpop.f32.mrb[0].mxu0
    %497 = vmatprep.mubr.bf16.mxu0 0
    %498 = vmatmul.mubr.bf16.gmra.mrb[0].mxu0 %v291
    %v499 = vpop.f32.mrb[0].mxu0
    %v500 = vadd.f32 0.0, %v499
    %v501 = vpop.f32.mrb[0].mxu0
    %v502 = vpop.f32.mrb[0].mxu0
    %v503 = vadd.f32 0.0, %v502
    %v504 = vpop.f32.mrb[0].mxu0
    %505 = vmatprep.mubr.bf16.mxu0 0
    %506 = vmatmul.mubr.bf16.gmra.mrb[0].mxu0 %v294
    %v507 = vpop.f32.mrb[0].mxu0
    %v508 = vadd.f32 0.0, %v507
    %v509 = vpop.f32.mrb[0].mxu0
    %v510 = vpop.f32.mrb[0].mxu0
    %v511 = vadd.f32 0.0, %v510
    %v512 = vpop.f32.mrb[0].mxu0
    %513 = vmatprep.mubr.bf16.mxu0 0
    %514 = vmatmul.mubr.bf16.gmra.mrb[0].mxu0 %v297
    %v515 = vpop.f32.mrb[0].mxu0
    %v516 = vadd.f32 0.0, %v515
    %v517 = vpop.f32.mrb[0].mxu0
    %v518 = vpop.f32.mrb[0].mxu0
    %v519 = vadd.f32 0.0, %v518
    %v520 = vpop.f32.mrb[0].mxu0
    %521 = vmatprep.mubr.bf16.mxu0 0
    %522 = vmatmul.mubr.bf16.gmra.mrb[0].mxu0 %v300
    %v523 = vpop.f32.mrb[0].mxu0
    %v524 = vadd.f32 0.0, %v523
    %v525 = vpop.f32.mrb[0].mxu0
    %v526 = vpop.f32.mrb[0].mxu0
    %v527 = vadd.f32 0.0, %v526
    %v528 = vpop.f32.mrb[0].mxu0
    %529 = vmatprep.mubr.bf16.mxu0 0
    %530 = vmatmul.mubr.bf16.gmra.mrb[0].mxu0 %v303
    %v531 = vpop.f32.mrb[0].mxu0
    %v532 = vadd.f32 0.0, %v531
    %v533 = vpop.f32.mrb[0].mxu0
    %v534 = vpop.f32.mrb[0].mxu0
    %v535 = vadd.f32 0.0, %v534
    %v536 = vpop.f32.mrb[0].mxu0
    %537 = vmatprep.mubr.bf16.mxu0 0
    %538 = vmatmul.mubr.bf16.gmra.mrb[0].mxu0 %v306
    %v539 = vpop.f32.mrb[0].mxu0
    %v540 = vadd.f32 0.0, %v539
    %v541 = vpop.f32.mrb[0].mxu0
    %v542 = vpop.f32.mrb[0].mxu0
    %v543 = vadd.f32 0.0, %v542
    %v544 = vpop.f32.mrb[0].mxu0
    %545 = vmatprep.mubr.bf16.mxu0 0
    %546 = vmatmul.mubr.bf16.gmra.mrb[0].mxu0 %v309
    %v547 = vpop.f32.mrb[0].mxu0
    %v548 = vadd.f32 0.0, %v547
    %v549 = vpop.f32.mrb[0].mxu0
    %v550 = vpop.f32.mrb[0].mxu0
    %v551 = vadd.f32 0.0, %v550
    %v552 = vpop.f32.mrb[0].mxu0
    %553 = vmatprep.mubr.bf16.mxu0 0
    %554 = vmatmul.mubr.bf16.gmra.mrb[0].mxu0 %v312
    %v555 = vpop.f32.mrb[0].mxu0
    %v556 = vadd.f32 0.0, %v555
    %v557 = vpop.f32.mrb[0].mxu0
    %v558 = vpop.f32.mrb[0].mxu0
    %v559 = vadd.f32 0.0, %v558
    %v560 = vpop.f32.mrb[0].mxu0
    %561 = vmatprep.mubr.bf16.mxu0 0
    %562 = vmatmul.mubr.bf16.gmra.mrb[0].mxu0 %v315
    %v563 = vpop.f32.mrb[0].mxu0
    %v564 = vadd.f32 0.0, %v563
    %v565 = vpop.f32.mrb[0].mxu0
    %v566 = vpop.f32.mrb[0].mxu0
    %v567 = vadd.f32 0.0, %v566
    %v568 = vpop.f32.mrb[0].mxu0
    %569 = vmatprep.mubr.bf16.mxu0 0
    %570 = vmatmul.mubr.bf16.gmra.mrb[0].mxu0 %v318
    %v571 = vpop.f32.mrb[0].mxu0
    %v572 = vadd.f32 0.0, %v571
    %v573 = vpop.f32.mrb[0].mxu0
    %v574 = vpop.f32.mrb[0].mxu0
    %v575 = vadd.f32 0.0, %v574
    %v576 = vpop.f32.mrb[0].mxu0
    %577 = vmatprep.mubr.bf16.mxu0 0
    %578 = vmatmul.mubr.bf16.gmra.mrb[0].mxu0 %v321
    %v579 = vpop.f32.mrb[0].mxu0
    %v580 = vadd.f32 0.0, %v579
    %v581 = vpop.f32.mrb[0].mxu0
    %v582 = vpop.f32.mrb[0].mxu0
    %v583 = vadd.f32 0.0, %v582
    %v584 = vpop.f32.mrb[0].mxu0
    %585 = vmatprep.mubr.bf16.mxu0 0
    %586 = vmatmul.mubr.bf16.gmra.mrb[0].mxu0 %v324
    %v587 = vpop.f32.mrb[0].mxu0
    %v588 = vadd.f32 0.0, %v587
    %v589 = vpop.f32.mrb[0].mxu0
    %v590 = vpop.f32.mrb[0].mxu0
    %v591 = vadd.f32 0.0, %v590
    %v592 = vpop.f32.mrb[0].mxu0
    %593 = vmatprep.mubr.bf16.mxu0 0
    %594 = vmatmul.mubr.bf16.gmra.mrb[0].mxu0 %v327
    %v595 = vpop.f32.mrb[0].mxu0
    %v596 = vadd.f32 0.0, %v595
    %v597 = vpop.f32.mrb[0].mxu0
    %v598 = vpop.f32.mrb[0].mxu0
    %v599 = vadd.f32 0.0, %v598
    %v600 = vpop.f32.mrb[0].mxu0
    %601 = vmatprep.mubr.bf16.mxu0 0
    %602 = vmatmul.mubr.bf16.gmra.mrb[0].mxu0 %v330
    %v603 = vpop.f32.mrb[0].mxu0
    %v604 = vadd.f32 0.0, %v603
    %v605 = vpop.f32.mrb[0].mxu0
    %v606 = vpop.f32.mrb[0].mxu0
    %v607 = vadd.f32 0.0, %v606
    %v608 = vpop.f32.mrb[0].mxu0
    %609 = vmatprep.mubr.bf16.mxu0 0
    %610 = vmatmul.mubr.bf16.gmra.mrb[0].mxu0 %v333
    %v611 = vpop.f32.mrb[0].mxu0
    %v612 = vadd.f32 0.0, %v611
    %v613 = vpop.f32.mrb[0].mxu0
    %v614 = vpop.f32.mrb[0].mxu0
    %v615 = vadd.f32 0.0, %v614
    %v616 = vpop.f32.mrb[0].mxu0
    %617 = vmatprep.mubr.bf16.mxu0 0
    %618 = vmatmul.mubr.bf16.gmra.mrb[0].mxu0 %v336
    %v619 = vpop.f32.mrb[0].mxu0
    %v620 = vadd.f32 0.0, %v619
    %v621 = vpop.f32.mrb[0].mxu0
    %v622 = vpop.f32.mrb[0].mxu0
    %v623 = vadd.f32 0.0, %v622
    %v624 = vpop.f32.mrb[0].mxu0
    %625 = vmatprep.mubr.bf16.mxu0 0
    %626 = vmatmul.mubr.bf16.gmra.mrb[0].mxu0 %v339
    %v627 = vpop.f32.mrb[0].mxu0
    %v628 = vadd.f32 0.0, %v627
    %v629 = vpop.f32.mrb[0].mxu0
    %v630 = vpop.f32.mrb[0].mxu0
    %v631 = vadd.f32 0.0, %v630
    %v632 = vpop.f32.mrb[0].mxu0
    %633 = vdwg.mxu0
    %v634 = vld [vmem:[%s2] sm:$0x1]
    %v636 = vlaneseq
    %v637 = vshrl.u32 %v636, 7
    %v638 = vsub.s32 0, %v637
    %v639 = vrot.slane %v634, %v638
    %v641 = vmul.f32 %v380, %v639
    %v642 = vmul.f32 %v383, %v639
    %v643 = vmul.f32 %v388, %v639
    %v644 = vmul.f32 %v391, %v639
    %v645 = vmul.f32 %v396, %v639
    %v646 = vmul.f32 %v399, %v639
    %v647 = vmul.f32 %v404, %v639
    %v648 = vmul.f32 %v407, %v639
    %v649 = vmul.f32 %v412, %v639
    %v650 = vmul.f32 %v415, %v639
    %v651 = vmul.f32 %v420, %v639
    %v652 = vmul.f32 %v423, %v639
    %v653 = vmul.f32 %v428, %v639
    %v654 = vmul.f32 %v431, %v639
    %v655 = vmul.f32 %v436, %v639
    %v656 = vmul.f32 %v439, %v639
    %v657 = vmul.f32 %v444, %v639
    %v658 = vmul.f32 %v447, %v639
    %v659 = vmul.f32 %v452, %v639
    %v660 = vmul.f32 %v455, %v639
    %v661 = vmul.f32 %v460, %v639
    %v662 = vmul.f32 %v463, %v639
    %v663 = vmul.f32 %v468, %v639
    %v664 = vmul.f32 %v471, %v639
    %v665 = vmul.f32 %v476, %v639
    %v666 = vmul.f32 %v479, %v639
    %v667 = vmul.f32 %v484, %v639
    %v668 = vmul.f32 %v487, %v639
    %v669 = vmul.f32 %v492, %v639
    %v670 = vmul.f32 %v495, %v639
    %v671 = vmul.f32 %v500, %v639
    %v672 = vmul.f32 %v503, %v639
    %v673 = vmul.f32 %v508, %v639
    %v674 = vmul.f32 %v511, %v639
    %v675 = vmul.f32 %v516, %v639
    %v676 = vmul.f32 %v519, %v639
    %v677 = vmul.f32 %v524, %v639
    %v678 = vmul.f32 %v527, %v639
    %v679 = vmul.f32 %v532, %v639
    %v680 = vmul.f32 %v535, %v639
    %v681 = vmul.f32 %v540, %v639
    %v682 = vmul.f32 %v543, %v639
    %v683 = vmul.f32 %v548, %v639
    %v684 = vmul.f32 %v551, %v639
    %v685 = vmul.f32 %v556, %v639
    %v686 = vmul.f32 %v559, %v639
    %v687 = vmul.f32 %v564, %v639
    %v688 = vmul.f32 %v567, %v639
    %v689 = vmul.f32 %v572, %v639
    %v690 = vmul.f32 %v575, %v639
    %v691 = vmul.f32 %v580, %v639
    %v692 = vmul.f32 %v583, %v639
    %v693 = vmul.f32 %v588, %v639
    %v694 = vmul.f32 %v591, %v639
    %v695 = vmul.f32 %v596, %v639
    %v696 = vmul.f32 %v599, %v639
    %v697 = vmul.f32 %v604, %v639
    %v698 = vmul.f32 %v607, %v639
    %v699 = vmul.f32 %v612, %v639
    %v700 = vmul.f32 %v615, %v639
    %v701 = vmul.f32 %v620, %v639
    %v702 = vmul.f32 %v623, %v639
    %v703 = vmul.f32 %v628, %v639
    %v704 = vmul.f32 %v631, %v639
    %v705 = vld [vmem:[%s3] sm:$0x1]
    %v707 = vlaneseq
    %v708 = vshrl.u32 %v707, 7
    %v709 = vsub.s32 0, %v708
    %v710 = vrot.slane %v705, %v709
    %v712 = vadd.f32 %v641, %v710
    %v713 = vadd.f32 %v642, %v710
    %v714 = vadd.f32 %v643, %v710
    %v715 = vadd.f32 %v644, %v710
    %v716 = vadd.f32 %v645, %v710
    %v717 = vadd.f32 %v646, %v710
    %v718 = vadd.f32 %v647, %v710
    %v719 = vadd.f32 %v648, %v710
    %v720 = vadd.f32 %v649, %v710
    %v721 = vadd.f32 %v650, %v710
    %v722 = vadd.f32 %v651, %v710
    %v723 = vadd.f32 %v652, %v710
    %v724 = vadd.f32 %v653, %v710
    %v725 = vadd.f32 %v654, %v710
    %v726 = vadd.f32 %v655, %v710
    %v727 = vadd.f32 %v656, %v710
    %v728 = vadd.f32 %v657, %v710
    %v729 = vadd.f32 %v658, %v710
    %v730 = vadd.f32 %v659, %v710
    %v731 = vadd.f32 %v660, %v710
    %v732 = vadd.f32 %v661, %v710
    %v733 = vadd.f32 %v662, %v710
    %v734 = vadd.f32 %v663, %v710
    %v735 = vadd.f32 %v664, %v710
    %v736 = vadd.f32 %v665, %v710
    %v737 = vadd.f32 %v666, %v710
    %v738 = vadd.f32 %v667, %v710
    %v739 = vadd.f32 %v668, %v710
    %v740 = vadd.f32 %v669, %v710
    %v741 = vadd.f32 %v670, %v710
    %v742 = vadd.f32 %v671, %v710
    %v743 = vadd.f32 %v672, %v710
    %v744 = vadd.f32 %v673, %v710
    %v745 = vadd.f32 %v674, %v710
    %v746 = vadd.f32 %v675, %v710
    %v747 = vadd.f32 %v676, %v710
    %v748 = vadd.f32 %v677, %v710
    %v749 = vadd.f32 %v678, %v710
    %v750 = vadd.f32 %v679, %v710
    %v751 = vadd.f32 %v680, %v710
    %v752 = vadd.f32 %v681, %v710
    %v753 = vadd.f32 %v682, %v710
    %v754 = vadd.f32 %v683, %v710
    %v755 = vadd.f32 %v684, %v710
    %v756 = vadd.f32 %v685, %v710
    %v757 = vadd.f32 %v686, %v710
    %v758 = vadd.f32 %v687, %v710
    %v759 = vadd.f32 %v688, %v710
    %v760 = vadd.f32 %v689, %v710
    %v761 = vadd.f32 %v690, %v710
    %v762 = vadd.f32 %v691, %v710
    %v763 = vadd.f32 %v692, %v710
    %v764 = vadd.f32 %v693, %v710
    %v765 = vadd.f32 %v694, %v710
    %v766 = vadd.f32 %v695, %v710
    %v767 = vadd.f32 %v696, %v710
    %v768 = vadd.f32 %v697, %v710
    %v769 = vadd.f32 %v698, %v710
    %v770 = vadd.f32 %v699, %v710
    %v771 = vadd.f32 %v700, %v710
    %v772 = vadd.f32 %v701, %v710
    %v773 = vadd.f32 %v702, %v710
    %v774 = vadd.f32 %v703, %v710
    %v775 = vadd.f32 %v704, %v710
    %v776 = vmax.f32 %v712, 0.0
    %v777 = vmax.f32 %v713, 0.0
    %v778 = vmax.f32 %v714, 0.0
    %v779 = vmax.f32 %v715, 0.0
    %v780 = vmax.f32 %v716, 0.0
    %v781 = vmax.f32 %v717, 0.0
    %v782 = vmax.f32 %v718, 0.0
    %v783 = vmax.f32 %v719, 0.0
    %v784 = vmax.f32 %v720, 0.0
    %v785 = vmax.f32 %v721, 0.0
    %v786 = vmax.f32 %v722, 0.0
    %v787 = vmax.f32 %v723, 0.0
    %v788 = vmax.f32 %v724, 0.0
    %v789 = vmax.f32 %v725, 0.0
    %v790 = vmax.f32 %v726, 0.0
    %v791 = vmax.f32 %v727, 0.0
    %v792 = vmax.f32 %v728, 0.0
    %v793 = vmax.f32 %v729, 0.0
    %v794 = vmax.f32 %v730, 0.0
    %v795 = vmax.f32 %v731, 0.0
    %v796 = vmax.f32 %v732, 0.0
    %v797 = vmax.f32 %v733, 0.0
    %v798 = vmax.f32 %v734, 0.0
    %v799 = vmax.f32 %v735, 0.0
    %v800 = vmax.f32 %v736, 0.0
    %v801 = vmax.f32 %v737, 0.0
    %v802 = vmax.f32 %v738, 0.0
    %v803 = vmax.f32 %v739, 0.0
    %v804 = vmax.f32 %v740, 0.0
    %v805 = vmax.f32 %v741, 0.0
    %v806 = vmax.f32 %v742, 0.0
    %v807 = vmax.f32 %v743, 0.0
    %v808 = vmax.f32 %v744, 0.0
    %v809 = vmax.f32 %v745, 0.0
    %v810 = vmax.f32 %v746, 0.0
    %v811 = vmax.f32 %v747, 0.0
    %v812 = vmax.f32 %v748, 0.0
    %v813 = vmax.f32 %v749, 0.0
    %v814 = vmax.f32 %v750, 0.0
    %v815 = vmax.f32 %v751, 0.0
    %v816 = vmax.f32 %v752, 0.0
    %v817 = vmax.f32 %v753, 0.0
    %v818 = vmax.f32 %v754, 0.0
    %v819 = vmax.f32 %v755, 0.0
    %v820 = vmax.f32 %v756, 0.0
    %v821 = vmax.f32 %v757, 0.0
    %v822 = vmax.f32 %v758, 0.0
    %v823 = vmax.f32 %v759, 0.0
    %v824 = vmax.f32 %v760, 0.0
    %v825 = vmax.f32 %v761, 0.0
    %v826 = vmax.f32 %v762, 0.0
    %v827 = vmax.f32 %v763, 0.0
    %v828 = vmax.f32 %v764, 0.0
    %v829 = vmax.f32 %v765, 0.0
    %v830 = vmax.f32 %v766, 0.0
    %v831 = vmax.f32 %v767, 0.0
    %v832 = vmax.f32 %v768, 0.0
    %v833 = vmax.f32 %v769, 0.0
    %v834 = vmax.f32 %v770, 0.0
    %v835 = vmax.f32 %v771, 0.0
    %v836 = vmax.f32 %v772, 0.0
    %v837 = vmax.f32 %v773, 0.0
    %v838 = vmax.f32 %v774, 0.0
    %v839 = vmax.f32 %v775, 0.0
    %v840 = vmin.f32 %v712, 0.0
    %v841 = vmin.f32 %v713, 0.0
    %v842 = vmin.f32 %v714, 0.0
    %v843 = vmin.f32 %v715, 0.0
    %v844 = vmin.f32 %v716, 0.0
    %v845 = vmin.f32 %v717, 0.0
    %v846 = vmin.f32 %v718, 0.0
    %v847 = vmin.f32 %v719, 0.0
    %v848 = vmin.f32 %v720, 0.0
    %v849 = vmin.f32 %v721, 0.0
    %v850 = vmin.f32 %v722, 0.0
    %v851 = vmin.f32 %v723, 0.0
    %v852 = vmin.f32 %v724, 0.0
    %v853 = vmin.f32 %v725, 0.0
    %v854 = vmin.f32 %v726, 0.0
    %v855 = vmin.f32 %v727, 0.0
    %v856 = vmin.f32 %v728, 0.0
    %v857 = vmin.f32 %v729, 0.0
    %v858 = vmin.f32 %v730, 0.0
    %v859 = vmin.f32 %v731, 0.0
    %v860 = vmin.f32 %v732, 0.0
    %v861 = vmin.f32 %v733, 0.0
    %v862 = vmin.f32 %v734, 0.0
    %v863 = vmin.f32 %v735, 0.0
    %v864 = vmin.f32 %v736, 0.0
    %v865 = vmin.f32 %v737, 0.0
    %v866 = vmin.f32 %v738, 0.0
    %v867 = vmin.f32 %v739, 0.0
    %v868 = vmin.f32 %v740, 0.0
    %v869 = vmin.f32 %v741, 0.0
    %v870 = vmin.f32 %v742, 0.0
    %v871 = vmin.f32 %v743, 0.0
    %v872 = vmin.f32 %v744, 0.0
    %v873 = vmin.f32 %v745, 0.0
    %v874 = vmin.f32 %v746, 0.0
    %v875 = vmin.f32 %v747, 0.0
    %v876 = vmin.f32 %v748, 0.0
    %v877 = vmin.f32 %v749, 0.0
    %v878 = vmin.f32 %v750, 0.0
    %v879 = vmin.f32 %v751, 0.0
    %v880 = vmin.f32 %v752, 0.0
    %v881 = vmin.f32 %v753, 0.0
    %v882 = vmin.f32 %v754, 0.0
    %v883 = vmin.f32 %v755, 0.0
    %v884 = vmin.f32 %v756, 0.0
    %v885 = vmin.f32 %v757, 0.0
    %v886 = vmin.f32 %v758, 0.0
    %v887 = vmin.f32 %v759, 0.0
    %v888 = vmin.f32 %v760, 0.0
    %v889 = vmin.f32 %v761, 0.0
    %v890 = vmin.f32 %v762, 0.0
    %v891 = vmin.f32 %v763, 0.0
    %v892 = vmin.f32 %v764, 0.0
    %v893 = vmin.f32 %v765, 0.0
    %v894 = vmin.f32 %v766, 0.0
    %v895 = vmin.f32 %v767, 0.0
    %v896 = vmin.f32 %v768, 0.0
    %v897 = vmin.f32 %v769, 0.0
    %v898 = vmin.f32 %v770, 0.0
    %v899 = vmin.f32 %v771, 0.0
    %v900 = vmin.f32 %v772, 0.0
    %v901 = vmin.f32 %v773, 0.0
    %v902 = vmin.f32 %v774, 0.0
    %v903 = vmin.f32 %v775, 0.0
    %v904 = vmul.f32 %v840, 0.25
    %v905 = vmul.f32 %v841, 0.25
    %v906 = vmul.f32 %v842, 0.25
    %v907 = vmul.f32 %v843, 0.25
    %v908 = vmul.f32 %v844, 0.25
    %v909 = vmul.f32 %v845, 0.25
    %v910 = vmul.f32 %v846, 0.25
    %v911 = vmul.f32 %v847, 0.25
    %v912 = vmul.f32 %v848, 0.25
    %v913 = vmul.f32 %v849, 0.25
    %v914 = vmul.f32 %v850, 0.25
    %v915 = vmul.f32 %v851, 0.25
    %v916 = vmul.f32 %v852, 0.25
    %v917 = vmul.f32 %v853, 0.25
    %v918 = vmul.f32 %v854, 0.25
    %v919 = vmul.f32 %v855, 0.25
    %v920 = vmul.f32 %v856, 0.25
    %v921 = vmul.f32 %v857, 0.25
    %v922 = vmul.f32 %v858, 0.25
    %v923 = vmul.f32 %v859, 0.25
    %v924 = vmul.f32 %v860, 0.25
    %v925 = vmul.f32 %v861, 0.25
    %v926 = vmul.f32 %v862, 0.25
    %v927 = vmul.f32 %v863, 0.25
    %v928 = vmul.f32 %v864, 0.25
    %v929 = vmul.f32 %v865, 0.25
    %v930 = vmul.f32 %v866, 0.25
    %v931 = vmul.f32 %v867, 0.25
    %v932 = vmul.f32 %v868, 0.25
    %v933 = vmul.f32 %v869, 0.25
    %v934 = vmul.f32 %v870, 0.25
    %v935 = vmul.f32 %v871, 0.25
    %v936 = vmul.f32 %v872, 0.25
    %v937 = vmul.f32 %v873, 0.25
    %v938 = vmul.f32 %v874, 0.25
    %v939 = vmul.f32 %v875, 0.25
    %v940 = vmul.f32 %v876, 0.25
    %v941 = vmul.f32 %v877, 0.25
    %v942 = vmul.f32 %v878, 0.25
    %v943 = vmul.f32 %v879, 0.25
    %v944 = vmul.f32 %v880, 0.25
    %v945 = vmul.f32 %v881, 0.25
    %v946 = vmul.f32 %v882, 0.25
    %v947 = vmul.f32 %v883, 0.25
    %v948 = vmul.f32 %v884, 0.25
    %v949 = vmul.f32 %v885, 0.25
    %v950 = vmul.f32 %v886, 0.25
    %v951 = vmul.f32 %v887, 0.25
    %v952 = vmul.f32 %v888, 0.25
    %v953 = vmul.f32 %v889, 0.25
    %v954 = vmul.f32 %v890, 0.25
    %v955 = vmul.f32 %v891, 0.25
    %v956 = vmul.f32 %v892, 0.25
    %v957 = vmul.f32 %v893, 0.25
    %v958 = vmul.f32 %v894, 0.25
    %v959 = vmul.f32 %v895, 0.25
    %v960 = vmul.f32 %v896, 0.25
    %v961 = vmul.f32 %v897, 0.25
    %v962 = vmul.f32 %v898, 0.25
    %v963 = vmul.f32 %v899, 0.25
    %v964 = vmul.f32 %v900, 0.25
    %v965 = vmul.f32 %v901, 0.25
    %v966 = vmul.f32 %v902, 0.25
    %v967 = vmul.f32 %v903, 0.25
    %v968 = vadd.f32 %v776, %v904
    %v969 = vadd.f32 %v777, %v905
    %v970 = vadd.f32 %v778, %v906
    %v971 = vadd.f32 %v779, %v907
    %v972 = vadd.f32 %v780, %v908
    %v973 = vadd.f32 %v781, %v909
    %v974 = vadd.f32 %v782, %v910
    %v975 = vadd.f32 %v783, %v911
    %v976 = vadd.f32 %v784, %v912
    %v977 = vadd.f32 %v785, %v913
    %v978 = vadd.f32 %v786, %v914
    %v979 = vadd.f32 %v787, %v915
    %v980 = vadd.f32 %v788, %v916
    %v981 = vadd.f32 %v789, %v917
    %v982 = vadd.f32 %v790, %v918
    %v983 = vadd.f32 %v791, %v919
    %v984 = vadd.f32 %v792, %v920
    %v985 = vadd.f32 %v793, %v921
    %v986 = vadd.f32 %v794, %v922
    %v987 = vadd.f32 %v795, %v923
    %v988 = vadd.f32 %v796, %v924
    %v989 = vadd.f32 %v797, %v925
    %v990 = vadd.f32 %v798, %v926
    %v991 = vadd.f32 %v799, %v927
    %v992 = vadd.f32 %v800, %v928
    %v993 = vadd.f32 %v801, %v929
    %v994 = vadd.f32 %v802, %v930
    %v995 = vadd.f32 %v803, %v931
    %v996 = vadd.f32 %v804, %v932
    %v997 = vadd.f32 %v805, %v933
    %v998 = vadd.f32 %v806, %v934
    %v999 = vadd.f32 %v807, %v935
    %v1000 = vadd.f32 %v808, %v936
    %v1001 = vadd.f32 %v809, %v937
    %v1002 = vadd.f32 %v810, %v938
    %v1003 = vadd.f32 %v811, %v939
    %v1004 = vadd.f32 %v812, %v940
    %v1005 = vadd.f32 %v813, %v941
    %v1006 = vadd.f32 %v814, %v942
    %v1007 = vadd.f32 %v815, %v943
    %v1008 = vadd.f32 %v816, %v944
    %v1009 = vadd.f32 %v817, %v945
    %v1010 = vadd.f32 %v818, %v946
    %v1011 = vadd.f32 %v819, %v947
    %v1012 = vadd.f32 %v820, %v948
    %v1013 = vadd.f32 %v821, %v949
    %v1014 = vadd.f32 %v822, %v950
    %v1015 = vadd.f32 %v823, %v951
    %v1016 = vadd.f32 %v824, %v952
    %v1017 = vadd.f32 %v825, %v953
    %v1018 = vadd.f32 %v826, %v954
    %v1019 = vadd.f32 %v827, %v955
    %v1020 = vadd.f32 %v828, %v956
    %v1021 = vadd.f32 %v829, %v957
    %v1022 = vadd.f32 %v830, %v958
    %v1023 = vadd.f32 %v831, %v959
    %v1024 = vadd.f32 %v832, %v960
    %v1025 = vadd.f32 %v833, %v961
    %v1026 = vadd.f32 %v834, %v962
    %v1027 = vadd.f32 %v835, %v963
    %v1028 = vadd.f32 %v836, %v964
    %v1029 = vadd.f32 %v837, %v965
    %v1030 = vadd.f32 %v838, %v966
    %v1031 = vadd.f32 %v839, %v967
    %v1032 = vpack.c.bf16 %v969, %v968
    %v1033 = vpack.c.bf16 %v971, %v970
    %v1034 = vpack.c.bf16 %v973, %v972
    %v1035 = vpack.c.bf16 %v975, %v974
    %v1036 = vpack.c.bf16 %v977, %v976
    %v1037 = vpack.c.bf16 %v979, %v978
    %v1038 = vpack.c.bf16 %v981, %v980
    %v1039 = vpack.c.bf16 %v983, %v982
    %v1040 = vpack.c.bf16 %v985, %v984
    %v1041 = vpack.c.bf16 %v987, %v986
    %v1042 = vpack.c.bf16 %v989, %v988
    %v1043 = vpack.c.bf16 %v991, %v990
    %v1044 = vpack.c.bf16 %v993, %v992
    %v1045 = vpack.c.bf16 %v995, %v994
    %v1046 = vpack.c.bf16 %v997, %v996
    %v1047 = vpack.c.bf16 %v999, %v998
    %v1048 = vpack.c.bf16 %v1001, %v1000
    %v1049 = vpack.c.bf16 %v1003, %v1002
    %v1050 = vpack.c.bf16 %v1005, %v1004
    %v1051 = vpack.c.bf16 %v1007, %v1006
    %v1052 = vpack.c.bf16 %v1009, %v1008
    %v1053 = vpack.c.bf16 %v1011, %v1010
    %v1054 = vpack.c.bf16 %v1013, %v1012
    %v1055 = vpack.c.bf16 %v1015, %v1014
    %v1056 = vpack.c.bf16 %v1017, %v1016
    %v1057 = vpack.c.bf16 %v1019, %v1018
    %v1058 = vpack.c.bf16 %v1021, %v1020
    %v1059 = vpack.c.bf16 %v1023, %v1022
    %v1060 = vpack.c.bf16 %v1025, %v1024
    %v1061 = vpack.c.bf16 %v1027, %v1026
    %v1062 = vpack.c.bf16 %v1029, %v1028
    %v1063 = vpack.c.bf16 %v1031, %v1030
    %v1096 = vunpack.c.l.b16 %v1032
    %v1097 = vunpack.c.h.b16 %v1032
    %v1098 = vunpack.c.l.b16 %v1033
    %v1099 = vunpack.c.h.b16 %v1033
    %v1100 = vunpack.c.l.b16 %v1034
    %v1101 = vunpack.c.h.b16 %v1034
    %v1102 = vunpack.c.l.b16 %v1035
    %v1103 = vunpack.c.h.b16 %v1035
    %v1104 = vunpack.c.l.b16 %v1036
    %v1105 = vunpack.c.h.b16 %v1036
    %v1106 = vunpack.c.l.b16 %v1037
    %v1107 = vunpack.c.h.b16 %v1037
    %v1108 = vunpack.c.l.b16 %v1038
    %v1109 = vunpack.c.h.b16 %v1038
    %v1110 = vunpack.c.l.b16 %v1039
    %v1111 = vunpack.c.h.b16 %v1039
    %v1112 = vunpack.c.l.b16 %v1040
    %v1113 = vunpack.c.h.b16 %v1040
    %v1114 = vunpack.c.l.b16 %v1041
    %v1115 = vunpack.c.h.b16 %v1041
    %v1116 = vunpack.c.l.b16 %v1042
    %v1117 = vunpack.c.h.b16 %v1042
    %v1118 = vunpack.c.l.b16 %v1043
    %v1119 = vunpack.c.h.b16 %v1043
    %v1120 = vunpack.c.l.b16 %v1044
    %v1121 = vunpack.c.h.b16 %v1044
    %v1122 = vunpack.c.l.b16 %v1045
    %v1123 = vunpack.c.h.b16 %v1045
    %v1124 = vunpack.c.l.b16 %v1046
    %v1125 = vunpack.c.h.b16 %v1046
    %v1126 = vunpack.c.l.b16 %v1047
    %v1127 = vunpack.c.h.b16 %v1047
    %v1128 = vunpack.c.l.b16 %v1048
    %v1129 = vunpack.c.h.b16 %v1048
    %v1130 = vunpack.c.l.b16 %v1049
    %v1131 = vunpack.c.h.b16 %v1049
    %v1132 = vunpack.c.l.b16 %v1050
    %v1133 = vunpack.c.h.b16 %v1050
    %v1134 = vunpack.c.l.b16 %v1051
    %v1135 = vunpack.c.h.b16 %v1051
    %v1136 = vunpack.c.l.b16 %v1052
    %v1137 = vunpack.c.h.b16 %v1052
    %v1138 = vunpack.c.l.b16 %v1053
    %v1139 = vunpack.c.h.b16 %v1053
    %v1140 = vunpack.c.l.b16 %v1054
    %v1141 = vunpack.c.h.b16 %v1054
    %v1142 = vunpack.c.l.b16 %v1055
    %v1143 = vunpack.c.h.b16 %v1055
    %v1144 = vunpack.c.l.b16 %v1056
    %v1145 = vunpack.c.h.b16 %v1056
    %v1146 = vunpack.c.l.b16 %v1057
    %v1147 = vunpack.c.h.b16 %v1057
    %v1148 = vunpack.c.l.b16 %v1058
    %v1149 = vunpack.c.h.b16 %v1058
    %v1150 = vunpack.c.l.b16 %v1059
    %v1151 = vunpack.c.h.b16 %v1059
    %v1152 = vunpack.c.l.b16 %v1060
    %v1153 = vunpack.c.h.b16 %v1060
    %v1154 = vunpack.c.l.b16 %v1061
    %v1155 = vunpack.c.h.b16 %v1061
    %v1156 = vunpack.c.l.b16 %v1062
    %v1157 = vunpack.c.h.b16 %v1062
    %v1158 = vunpack.c.l.b16 %v1063
    %v1159 = vunpack.c.h.b16 %v1063
    %v1160 = vpack.c.b16 %v1096, %v1096
    %v1161 = vpack.c.b16 %v1097, %v1097
    %v1162 = vpack.c.b16 %v1098, %v1098
    %v1163 = vpack.c.b16 %v1099, %v1099
    %v1164 = vpack.c.b16 %v1100, %v1100
    %v1165 = vpack.c.b16 %v1101, %v1101
    %v1166 = vpack.c.b16 %v1102, %v1102
    %v1167 = vpack.c.b16 %v1103, %v1103
    %v1168 = vpack.c.b16 %v1104, %v1104
    %v1169 = vpack.c.b16 %v1105, %v1105
    %v1170 = vpack.c.b16 %v1106, %v1106
    %v1171 = vpack.c.b16 %v1107, %v1107
    %v1172 = vpack.c.b16 %v1108, %v1108
    %v1173 = vpack.c.b16 %v1109, %v1109
    %v1174 = vpack.c.b16 %v1110, %v1110
    %v1175 = vpack.c.b16 %v1111, %v1111
    %v1176 = vpack.c.b16 %v1112, %v1112
    %v1177 = vpack.c.b16 %v1113, %v1113
    %v1178 = vpack.c.b16 %v1114, %v1114
    %v1179 = vpack.c.b16 %v1115, %v1115
    %v1180 = vpack.c.b16 %v1116, %v1116
    %v1181 = vpack.c.b16 %v1117, %v1117
    %v1182 = vpack.c.b16 %v1118, %v1118
    %v1183 = vpack.c.b16 %v1119, %v1119
    %v1184 = vpack.c.b16 %v1120, %v1120
    %v1185 = vpack.c.b16 %v1121, %v1121
    %v1186 = vpack.c.b16 %v1122, %v1122
    %v1187 = vpack.c.b16 %v1123, %v1123
    %v1188 = vpack.c.b16 %v1124, %v1124
    %v1189 = vpack.c.b16 %v1125, %v1125
    %v1190 = vpack.c.b16 %v1126, %v1126
    %v1191 = vpack.c.b16 %v1127, %v1127
    %v1192 = vpack.c.b16 %v1128, %v1128
    %v1193 = vpack.c.b16 %v1129, %v1129
    %v1194 = vpack.c.b16 %v1130, %v1130
    %v1195 = vpack.c.b16 %v1131, %v1131
    %v1196 = vpack.c.b16 %v1132, %v1132
    %v1197 = vpack.c.b16 %v1133, %v1133
    %v1198 = vpack.c.b16 %v1134, %v1134
    %v1199 = vpack.c.b16 %v1135, %v1135
    %v1200 = vpack.c.b16 %v1136, %v1136
    %v1201 = vpack.c.b16 %v1137, %v1137
    %v1202 = vpack.c.b16 %v1138, %v1138
    %v1203 = vpack.c.b16 %v1139, %v1139
    %v1204 = vpack.c.b16 %v1140, %v1140
    %v1205 = vpack.c.b16 %v1141, %v1141
    %v1206 = vpack.c.b16 %v1142, %v1142
    %v1207 = vpack.c.b16 %v1143, %v1143
    %v1208 = vpack.c.b16 %v1144, %v1144
    %v1209 = vpack.c.b16 %v1145, %v1145
    %v1210 = vpack.c.b16 %v1146, %v1146
    %v1211 = vpack.c.b16 %v1147, %v1147
    %v1212 = vpack.c.b16 %v1148, %v1148
    %v1213 = vpack.c.b16 %v1149, %v1149
    %v1214 = vpack.c.b16 %v1150, %v1150
    %v1215 = vpack.c.b16 %v1151, %v1151
    %v1216 = vpack.c.b16 %v1152, %v1152
    %v1217 = vpack.c.b16 %v1153, %v1153
    %v1218 = vpack.c.b16 %v1154, %v1154
    %v1219 = vpack.c.b16 %v1155, %v1155
    %v1220 = vpack.c.b16 %v1156, %v1156
    %v1221 = vpack.c.b16 %v1157, %v1157
    %v1222 = vpack.c.b16 %v1158, %v1158
    %v1223 = vpack.c.b16 %v1159, %v1159
    %1288 = vst [vmem:[#allocation2] sm:$0xf] %v1160
    %1289 = vst [vmem:[#allocation2 + $0x4] sm:$0xf] %v1161
    %1290 = vst [vmem:[#allocation2 + $0x8] sm:$0xf] %v1162
    %1291 = vst [vmem:[#allocation2 + $0xc] sm:$0xf] %v1163
    %1292 = vst [vmem:[#allocation2 + $0x10] sm:$0xf] %v1164
    %1293 = vst [vmem:[#allocation2 + $0x14] sm:$0xf] %v1165
    %1294 = vst [vmem:[#allocation2 + $0x18] sm:$0xf] %v1166
    %1295 = vst [vmem:[#allocation2 + $0x1c] sm:$0xf] %v1167
    %1296 = vst [vmem:[#allocation2 + $0x20] sm:$0xf] %v1168
    %1297 = vst [vmem:[#allocation2 + $0x24] sm:$0xf] %v1169
    %1298 = vst [vmem:[#allocation2 + $0x28] sm:$0xf] %v1170
    %1299 = vst [vmem:[#allocation2 + $0x2c] sm:$0xf] %v1171
    %1300 = vst [vmem:[#allocation2 + $0x30] sm:$0xf] %v1172
    %1301 = vst [vmem:[#allocation2 + $0x34] sm:$0xf] %v1173
    %1302 = vst [vmem:[#allocation2 + $0x38] sm:$0xf] %v1174
    %1303 = vst [vmem:[#allocation2 + $0x3c] sm:$0xf] %v1175
    %1304 = vst [vmem:[#allocation2 + $0x40] sm:$0xf] %v1176
    %1305 = vst [vmem:[#allocation2 + $0x44] sm:$0xf] %v1177
    %1306 = vst [vmem:[#allocation2 + $0x48] sm:$0xf] %v1178
    %1307 = vst [vmem:[#allocation2 + $0x4c] sm:$0xf] %v1179
    %1308 = vst [vmem:[#allocation2 + $0x50] sm:$0xf] %v1180
    %1309 = vst [vmem:[#allocation2 + $0x54] sm:$0xf] %v1181
    %1310 = vst [vmem:[#allocation2 + $0x58] sm:$0xf] %v1182
    %1311 = vst [vmem:[#allocation2 + $0x5c] sm:$0xf] %v1183
    %1312 = vst [vmem:[#allocation2 + $0x60] sm:$0xf] %v1184
    %1313 = vst [vmem:[#allocation2 + $0x64] sm:$0xf] %v1185
    %1314 = vst [vmem:[#allocation2 + $0x68] sm:$0xf] %v1186
    %1315 = vst [vmem:[#allocation2 + $0x6c] sm:$0xf] %v1187
    %1316 = vst [vmem:[#allocation2 + $0x70] sm:$0xf] %v1188
    %1317 = vst [vmem:[#allocation2 + $0x74] sm:$0xf] %v1189
    %1318 = vst [vmem:[#allocation2 + $0x78] sm:$0xf] %v1190
    %1319 = vst [vmem:[#allocation2 + $0x7c] sm:$0xf] %v1191
    %1320 = vst [vmem:[#allocation2 + $0x80] sm:$0xf] %v1192
    %1321 = vst [vmem:[#allocation2 + $0x84] sm:$0xf] %v1193
    %1322 = vst [vmem:[#allocation2 + $0x88] sm:$0xf] %v1194
    %1323 = vst [vmem:[#allocation2 + $0x8c] sm:$0xf] %v1195
    %1324 = vst [vmem:[#allocation2 + $0x90] sm:$0xf] %v1196
    %1325 = vst [vmem:[#allocation2 + $0x94] sm:$0xf] %v1197
    %1326 = vst [vmem:[#allocation2 + $0x98] sm:$0xf] %v1198
    %1327 = vst [vmem:[#allocation2 + $0x9c] sm:$0xf] %v1199
    %1328 = vst [vmem:[#allocation2 + $0xa0] sm:$0xf] %v1200
    %1329 = vst [vmem:[#allocation2 + $0xa4] sm:$0xf] %v1201
    %1330 = vst [vmem:[#allocation2 + $0xa8] sm:$0xf] %v1202
    %1331 = vst [vmem:[#allocation2 + $0xac] sm:$0xf] %v1203
    %1332 = vst [vmem:[#allocation2 + $0xb0] sm:$0xf] %v1204
    %1333 = vst [vmem:[#allocation2 + $0xb4] sm:$0xf] %v1205
    %1334 = vst [vmem:[#allocation2 + $0xb8] sm:$0xf] %v1206
    %1335 = vst [vmem:[#allocation2 + $0xbc] sm:$0xf] %v1207
    %1336 = vst [vmem:[#allocation2 + $0xc0] sm:$0xf] %v1208
    %1337 = vst [vmem:[#allocation2 + $0xc4] sm:$0xf] %v1209
    %1338 = vst [vmem:[#allocation2 + $0xc8] sm:$0xf] %v1210
    %1339 = vst [vmem:[#allocation2 + $0xcc] sm:$0xf] %v1211
    %1340 = vst [vmem:[#allocation2 + $0xd0] sm:$0xf] %v1212
    %1341 = vst [vmem:[#allocation2 + $0xd4] sm:$0xf] %v1213
    %1342 = vst [vmem:[#allocation2 + $0xd8] sm:$0xf] %v1214
    %1343 = vst [vmem:[#allocation2 + $0xdc] sm:$0xf] %v1215
    %1344 = vst [vmem:[#allocation2 + $0xe0] sm:$0xf] %v1216
    %1345 = vst [vmem:[#allocation2 + $0xe4] sm:$0xf] %v1217
    %1346 = vst [vmem:[#allocation2 + $0xe8] sm:$0xf] %v1218
    %1347 = vst [vmem:[#allocation2 + $0xec] sm:$0xf] %v1219
    %1348 = vst [vmem:[#allocation2 + $0xf0] sm:$0xf] %v1220
    %1349 = vst [vmem:[#allocation2 + $0xf4] sm:$0xf] %v1221
    %1350 = vst [vmem:[#allocation2 + $0xf8] sm:$0xf] %v1222
    %1351 = vst [vmem:[#allocation2 + $0xfc] sm:$0xf] %v1223
    // Predicated region
    $region18: #{tpu_custom_call.1} parent=1 // pred_check
      _
    $region19: #{tpu_custom_call.1} parent=1 // pred_check_branch
      %1353 = sbr.rel (0) target = $region21
    $region20: #{tpu_custom_call.1} parent=1 // pred_region
      %s1355 = ssub.s32 4096, 4096
      %1356 = vsyncadd [#allocation3], %s1355
      %s1357 = sshll.u32 [#allocation2], 4
      %s1358 = int_to_ptr.vmem [resolvable:$true] %s1357
      %1363 = dma.vmem_to_hbm [thread:$0]  %s1358, 4096, %s4, [#allocation3], 64, 64, 4
    $region21: #{tpu_custom_call.1} parent=1 // pred_fallthru
      _
    // Predicated region
    $region22: #{tpu_custom_call.1} parent=1 // pred_check
      _
    $region23: #{tpu_custom_call.1} parent=1 // pred_check_branch
      %1365 = sbr.rel (0) target = $region25
    $region24: #{tpu_custom_call.1} parent=1 // pred_region
      %1366 = dma.done [#allocation3], 4096
    $region25: #{tpu_custom_call.1} parent=1 // pred_fallthru
      _
    %1367 = vsyncpa [#allocation3], 1

</llo_original>
